<compile_context>
chip_gen: v7x
topology: tpu7x:2x2x1
jax: 0.10.0
libtpu: 0.0.40
codegen_flags: <defaults>
</compile_context>

<pallas_src>
import math
import jax
import jax.numpy as jnp
from jax.experimental import pallas as pl
from jax.experimental.pallas import tpu as pltpu

# Module hyper-parameters (from the reference script)
INPUT_SIZE = 10      # len(X_cols)
HIDDEN1 = 15
HIDDEN2 = 15
OUTPUT_SIZE = 1      # len(Yhat_cols)
LEAKY_SLOPE = 0.01   # nn.LeakyReLU default negative_slope


def mlp_kernel(x_ref, w1_ref, b1_ref, w2_ref, b2_ref, w3_ref, b3_ref, ot_ref):
    # x_ref: (INPUT_SIZE, TM) feature-major tile -> batch on the lane axis.
    x = x_ref[...]

    # l1 + LeakyReLU :  h1 = W1 @ x  -> (H1, TM)
    h1 = jnp.dot(w1_ref[...], x, preferred_element_type=jnp.float32) + b1_ref[...]
    h1 = jnp.where(h1 >= 0, h1, LEAKY_SLOPE * h1)
    # dropout1: identity in eval mode
    # TODO(synk): train-mode dropout would need pltpu.prng_seed + prng_random_bits masking.

    # l2 + Sigmoid :  h2 = W2 @ h1  -> (H2, TM)
    h2 = jnp.dot(w2_ref[...], h1, preferred_element_type=jnp.float32) + b2_ref[...]
    # sigmoid via EUP exp + approximate EUP reciprocal (VALU slots stay free).
    # Clamp the exponent so h2 << 0 gives exp -> large-but-finite -> recip -> ~0,
    # never reciprocal(inf).
    e = jnp.exp(jnp.minimum(-h2, 60.0))
    h2 = pl.reciprocal(1.0 + e, approx=True)
    # dropout2: identity in eval mode

    # l3 : (1,H2) @ (H2,TM) done as VPU FMA + sublane (XLU) reduction -> (1, TM)
    # (1-row MXU results pay full push/drain latency; VPU/XLU have slack here.)
    w3col = w3_ref[...].reshape(HIDDEN2, 1)                     # (H2, 1), same row-major order
    out_t = jnp.sum(w3col * h2, axis=0, keepdims=True) + b3_ref[...]   # (1, TM) lane-dense
    ot_ref[...] = out_t.astype(ot_ref.dtype)


def _round_up(x, m):
    return ((x + m - 1) // m) * m


def neural_net_forward(x, params, *, tm=32768):
    """x: [B, INPUT_SIZE] float32 (PyTorch orientation). Returns [B, OUTPUT_SIZE].

    Pipelines that already store X feature-major ([INPUT_SIZE, B]) should pass it
    directly (skip the transpose below) — the kernel itself consumes feature-major.
    """
    B = x.shape[0]

    # Layout plumbing: feature-major, lane-dense over the batch.
    x_fm = x.T  # (INPUT_SIZE, B)

    # Tile size: multiple of 128 lanes; shrink for small batches; cap around B/2 so
    # on v7x both TensorCores receive at least one tile each for large batches.
    tm_eff = max(128, min(tm, _round_up(max(B // 2, 1), 128)))
    n_tiles = pl.cdiv(B, tm_eff)   # ragged last tile is masked by Pallas (no jnp.pad)

    # Weights/biases: full-array blocks with constant index maps -> VMEM-resident.
    const = lambda shape: pl.BlockSpec(shape, lambda i: (0, 0))

    out_t = pl.pallas_call(
        mlp_kernel,
        out_shape=jax.ShapeDtypeStruct((OUTPUT_SIZE, B), jnp.float32),
        grid=(n_tiles,),
        in_specs=[
            pl.BlockSpec((INPUT_SIZE, tm_eff), lambda i: (0, i)),  # x: batch-tiled, lane-dense
            const((HIDDEN1, INPUT_SIZE)),                           # w1
            const((HIDDEN1, 1)),                                    # b1
            const((HIDDEN2, HIDDEN1)),                              # w2
            const((HIDDEN2, 1)),                                    # b2
            const((OUTPUT_SIZE, HIDDEN2)),                          # w3
            const((OUTPUT_SIZE, 1)),                                # b3
        ],
        out_specs=pl.BlockSpec((OUTPUT_SIZE, tm_eff), lambda i: (0, i)),
        compiler_params=pltpu.CompilerParams(
            dimension_semantics=("parallel",),          # megacore-shard the batch axis
            vmem_limit_bytes=32 * 1024 * 1024,          # explicit budget (v5e default is 16 MiB)
        ),
    )(x_fm, params["w1"], params["b1"], params["w2"], params["b2"],
      params["w3"], params["b3"])

    # (1, B) -> (B, 1) is a pure reshape (same row-major order), not a transpose.
    return out_t.reshape(B, OUTPUT_SIZE)


def init_params(key):
    """Deterministic init mimicking nn.Linear default (uniform(+-1/sqrt(fan_in)))."""
    ks = jax.random.split(key, 6)

    def linear(kw, kb, fan_in, fan_out):
        bound = 1.0 / math.sqrt(fan_in)
        # PyTorch layout: weight [out_features, in_features], bias as column [out, 1]
        w = jax.random.uniform(kw, (fan_out, fan_in), jnp.float32, -bound, bound)
        b = jax.random.uniform(kb, (fan_out, 1), jnp.float32, -bound, bound)
        return w, b

    w1, b1 = linear(ks[0], ks[1], INPUT_SIZE, HIDDEN1)
    w2, b2 = linear(ks[2], ks[3], HIDDEN1, HIDDEN2)
    w3, b3 = linear(ks[4], ks[5], HIDDEN2, OUTPUT_SIZE)
    return {"w1": w1, "b1": b1, "w2": w2, "b2": b2, "w3": w3, "b3": b3}


def reference_forward(x, p):
    h1 = x @ p["w1"].T + p["b1"].T
    h1 = jnp.where(h1 >= 0, h1, LEAKY_SLOPE * h1)
    h2 = h1 @ p["w2"].T + p["b2"].T
    h2 = jax.nn.sigmoid(h2)
    return h2 @ p["w3"].T + p["b3"].T


if __name__ == "__main__":
    key = jax.random.PRNGKey(0)
    k_x, k_p = jax.random.split(key)

    batch = 8  # small smoke-test batch; kernel uses one 128-lane tile with masked edges
    x = jax.random.normal(k_x, (batch, INPUT_SIZE), jnp.float32)
    params = init_params(k_p)

    out = jax.block_until_ready(neural_net_forward(x, params))
    ref = reference_forward(x, params)

    assert out.shape == (batch, OUTPUT_SIZE)
    # approx EUP reciprocal in the sigmoid -> ~2^-12 relative error, well inside 5e-3
    assert jnp.allclose(out, ref, atol=5e-3, rtol=5e-3), float(jnp.max(jnp.abs(out - ref)))

    print("KERNEL_OK")
</pallas_src>

<mosaic_0001>
module attributes {stable_mosaic.version = 11 : i64} {
  func.func @mlp_kernel(%arg0: i32, %arg1: memref<10x128xf32, #tpu.memory_space<vmem>>, %arg2: memref<15x10xf32, #tpu.memory_space<vmem>>, %arg3: memref<15x1xf32, #tpu.memory_space<vmem>>, %arg4: memref<15x15xf32, #tpu.memory_space<vmem>>, %arg5: memref<15x1xf32, #tpu.memory_space<vmem>>, %arg6: memref<1x15xf32, #tpu.memory_space<vmem>>, %arg7: memref<1x1xf32, #tpu.memory_space<vmem>>, %arg8: memref<1x128xf32, #tpu.memory_space<vmem>>) attributes {dimension_semantics = [#tpu.dimension_semantics<parallel>], iteration_bounds = array<i64: 1>, scalar_prefetch = 0 : i64, scratch_operands = 0 : i64, tpu.core_type = #tpu.core_type<tc>, window_params = [{transform_indices = @transform_0, window_bounds = array<i64: 10, 128>}, {pipeline_mode = #tpu.pipeline_mode<synchronous>, transform_indices = @transform_1, window_bounds = array<i64: 15, 10>}, {pipeline_mode = #tpu.pipeline_mode<synchronous>, transform_indices = @transform_2, window_bounds = array<i64: 15, 1>}, {pipeline_mode = #tpu.pipeline_mode<synchronous>, transform_indices = @transform_3, window_bounds = array<i64: 15, 15>}, {pipeline_mode = #tpu.pipeline_mode<synchronous>, transform_indices = @transform_4, window_bounds = array<i64: 15, 1>}, {pipeline_mode = #tpu.pipeline_mode<synchronous>, transform_indices = @transform_5, window_bounds = array<i64: 1, 15>}, {pipeline_mode = #tpu.pipeline_mode<synchronous>, transform_indices = @transform_6, window_bounds = array<i64: 1, 1>}, {transform_indices = @transform_7, window_bounds = array<i64: 1, 128>}]} {
    %c0 = arith.constant 0 : index
    %c0_0 = arith.constant 0 : index
    %0 = vector.load %arg1[%c0, %c0_0] : memref<10x128xf32, #tpu.memory_space<vmem>>, vector<10x128xf32>
    %c0_1 = arith.constant 0 : index
    %c0_2 = arith.constant 0 : index
    %1 = vector.load %arg2[%c0_1, %c0_2] : memref<15x10xf32, #tpu.memory_space<vmem>>, vector<15x10xf32>
    %cst = arith.constant dense<0.000000e+00> : vector<15x128xf32>
    %2 = tpu.matmul %1, %0, %cst {dimension_numbers = #tpu.dot_dimension_numbers<[1], [0], [0], [1], [0, 0, 1, 1], [], []>} : vector<15x10xf32>, vector<10x128xf32>, vector<15x128xf32> -> vector<15x128xf32>
    %c0_3 = arith.constant 0 : index
    %c0_4 = arith.constant 0 : index
    %3 = vector.load %arg3[%c0_3, %c0_4] : memref<15x1xf32, #tpu.memory_space<vmem>>, vector<15x1xf32>
    %4 = vector.broadcast %3 : vector<15x1xf32> to vector<15x128xf32>
    %5 = arith.addf %2, %4 : vector<15x128xf32>
    %cst_5 = arith.constant 0.000000e+00 : f32
    %6 = vector.broadcast %cst_5 : f32 to vector<15x128xf32>
    %7 = arith.cmpf oge, %5, %6 : vector<15x128xf32>
    %cst_6 = arith.constant 0.00999999977 : f32
    %8 = vector.broadcast %cst_6 : f32 to vector<15x128xf32>
    %9 = arith.mulf %8, %5 : vector<15x128xf32>
    %10 = arith.select %7, %5, %9 : vector<15x128xi1>, vector<15x128xf32>
    %c0_7 = arith.constant 0 : index
    %c0_8 = arith.constant 0 : index
    %11 = vector.load %arg4[%c0_7, %c0_8] : memref<15x15xf32, #tpu.memory_space<vmem>>, vector<15x15xf32>
    %cst_9 = arith.constant dense<0.000000e+00> : vector<15x128xf32>
    %12 = tpu.matmul %11, %10, %cst_9 {dimension_numbers = #tpu.dot_dimension_numbers<[1], [0], [0], [1], [0, 0, 1, 1], [], []>} : vector<15x15xf32>, vector<15x128xf32>, vector<15x128xf32> -> vector<15x128xf32>
    %c0_10 = arith.constant 0 : index
    %c0_11 = arith.constant 0 : index
    %13 = vector.load %arg5[%c0_10, %c0_11] : memref<15x1xf32, #tpu.memory_space<vmem>>, vector<15x1xf32>
    %14 = vector.broadcast %13 : vector<15x1xf32> to vector<15x128xf32>
    %15 = arith.addf %12, %14 : vector<15x128xf32>
    %cst_12 = arith.constant 0.000000e+00 : f32
    %16 = vector.broadcast %cst_12 : f32 to vector<15x128xf32>
    %17 = arith.subf %16, %15 : vector<15x128xf32>
    %cst_13 = arith.constant 6.000000e+01 : f32
    %18 = vector.broadcast %cst_13 : f32 to vector<15x128xf32>
    %19 = arith.minimumf %17, %18 : vector<15x128xf32>
    %20 = math.exp %19 : vector<15x128xf32>
    %cst_14 = arith.constant 1.000000e+00 : f32
    %21 = vector.broadcast %cst_14 : f32 to vector<15x128xf32>
    %22 = arith.addf %21, %20 : vector<15x128xf32>
    %23 = tpu.reciprocal %22 {approx = true} : vector<15x128xf32> -> vector<15x128xf32>
    %c0_15 = arith.constant 0 : index
    %c0_16 = arith.constant 0 : index
    %24 = vector.load %arg6[%c0_15, %c0_16] : memref<1x15xf32, #tpu.memory_space<vmem>>, vector<1x15xf32>
    %25 = vector.shape_cast %24 : vector<1x15xf32> to vector<15x1xf32>
    %26 = vector.broadcast %25 : vector<15x1xf32> to vector<15x128xf32>
    %27 = arith.mulf %26, %23 : vector<15x128xf32>
    %cst_17 = arith.constant dense<0.000000e+00> : vector<128xf32>
    %28 = vector.multi_reduction <add>, %27, %cst_17 [0] : vector<15x128xf32> to vector<128xf32>
    %29 = vector.shape_cast %28 : vector<128xf32> to vector<1x128xf32>
    %c0_18 = arith.constant 0 : index
    %c0_19 = arith.constant 0 : index
    %30 = vector.load %arg7[%c0_18, %c0_19] : memref<1x1xf32, #tpu.memory_space<vmem>>, vector<1x1xf32>
    %31 = vector.broadcast %30 : vector<1x1xf32> to vector<1x128xf32>
    %32 = arith.addf %29, %31 : vector<1x128xf32>
    %c0_20 = arith.constant 0 : index
    %c0_21 = arith.constant 0 : index
    %33 = vector.load %arg8[%c0_20, %c0_21] : memref<1x128xf32, #tpu.memory_space<vmem>>, vector<1x128xf32>
    tpu.vector_store %arg8[%c0_20, %c0_21], %32 {strides = array<i32>} : memref<1x128xf32, #tpu.memory_space<vmem>>, vector<1x128xf32>,
    return
  }
  func.func @transform_0(%arg0: i32) -> (i32, i32) {
    %c0_i32 = arith.constant 0 : i32
    %c0_i32_0 = arith.constant 0 : i32
    return %c0_i32, %arg0 : i32, i32
  }
  func.func @transform_1(%arg0: i32) -> (i32, i32) {
    %c0_i32 = arith.constant 0 : i32
    %c0_i32_0 = arith.constant 0 : i32
    %c0_i32_1 = arith.constant 0 : i32
    return %c0_i32, %c0_i32_0 : i32, i32
  }
  func.func @transform_2(%arg0: i32) -> (i32, i32) {
    %c0_i32 = arith.constant 0 : i32
    %c0_i32_0 = arith.constant 0 : i32
    %c0_i32_1 = arith.constant 0 : i32
    return %c0_i32, %c0_i32_0 : i32, i32
  }
  func.func @transform_3(%arg0: i32) -> (i32, i32) {
    %c0_i32 = arith.constant 0 : i32
    %c0_i32_0 = arith.constant 0 : i32
    %c0_i32_1 = arith.constant 0 : i32
    return %c0_i32, %c0_i32_0 : i32, i32
  }
  func.func @transform_4(%arg0: i32) -> (i32, i32) {
    %c0_i32 = arith.constant 0 : i32
    %c0_i32_0 = arith.constant 0 : i32
    %c0_i32_1 = arith.constant 0 : i32
    return %c0_i32, %c0_i32_0 : i32, i32
  }
  func.func @transform_5(%arg0: i32) -> (i32, i32) {
    %c0_i32 = arith.constant 0 : i32
    %c0_i32_0 = arith.constant 0 : i32
    %c0_i32_1 = arith.constant 0 : i32
    return %c0_i32, %c0_i32_0 : i32, i32
  }
  func.func @transform_6(%arg0: i32) -> (i32, i32) {
    %c0_i32 = arith.constant 0 : i32
    %c0_i32_0 = arith.constant 0 : i32
    %c0_i32_1 = arith.constant 0 : i32
    return %c0_i32, %c0_i32_0 : i32, i32
  }
  func.func @transform_7(%arg0: i32) -> (i32, i32) {
    %c0_i32 = arith.constant 0 : i32
    %c0_i32_0 = arith.constant 0 : i32
    return %c0_i32, %arg0 : i32, i32
  }
}

</mosaic_0001>

<llo_original>
// kernel: tpu_custom_call.1
$region0: #{tpu_custom_call.1}
  #allocation0 [shape = 'u32[]', space=smem, size = 0x4, offset = 0x4, fixed_abs, tag = 'smem constant byte address 0x4 - core index']
  #allocation1 [shape = 'u32[144,128]{1,0:T(1,128)}', space=vmem, size = 0x12000, scoped, tag = 'internal scratch']
  #allocation2 [shape = 'f32[1,1]{1,0:T(1,128)S(1)}', space=vmem, size = 0x200, scoped, tag = 'scoped memory for tpu_custom_call.1']
  %s0 = inlined_call_operand.vmem [shape: f32[10,8], index: 0, kind: input, shape index: {}]
  %s1 = inlined_call_operand.vmem [shape: f32[15,10], index: 1, kind: input, shape index: {}]
  %s2 = inlined_call_operand.vmem [shape: f32[15,1], index: 2, kind: input, shape index: {}]
  %s3 = inlined_call_operand.vmem [shape: f32[15,15], index: 3, kind: input, shape index: {}]
  %s4 = inlined_call_operand.vmem [shape: f32[15,1], index: 4, kind: input, shape index: {}]
  %s5 = inlined_call_operand.vmem [shape: f32[1,15], index: 5, kind: input, shape index: {}]
  %s6 = inlined_call_operand.<no memory space> [shape: f32[1,1], index: 6, kind: input, shape index: {}]
  %s7 = inlined_call_operand.hbm [shape: f32[1,8], index: 7, kind: output, shape index: {}]
  %s8 = sld [smem:[#allocation0]]
  $region38: #{tpu_custom_call.1} parent=0
    _
  %s10 = ssub.s32 1, %s8
  %s11 = scalar_select 0, %s10, %s8
  %v12 = vstv %s6
  %13 = vst [vmem:[#allocation2] sm:$0x1] %v12
  $region1: #{tpu_custom_call.1} parent=0
    #allocation3 [shape = 'u8[512]{0}', space=vmem, size = 0x400, scoped, tag = 'output window, operand 0, single buffered']
    #allocation4 [shape = 's32[1]{0}', space=sflag, size = 0x4, scoped, tag = 'scoped memory for tpu_custom_call.1']
    %14 = vsyncpa [#allocation4], 0
    // Predicated region
    $region2: #{tpu_custom_call.1} parent=1 // pred_check
      _
    $region3: #{tpu_custom_call.1} parent=1 // pred_check_branch
      %16 = sbr.rel (0) target = $region5
    $region4: #{tpu_custom_call.1} parent=1 // pred_region
      _
    $region5: #{tpu_custom_call.1} parent=1 // pred_fallthru
      _
    // Predicated region
    $region6: #{tpu_custom_call.1} parent=1 // pred_check
      _
    $region7: #{tpu_custom_call.1} parent=1 // pred_check_branch
      %18 = sbr.rel (0) target = $region9
    $region8: #{tpu_custom_call.1} parent=1 // pred_region
      _
    $region9: #{tpu_custom_call.1} parent=1 // pred_fallthru
      _
    // Predicated region
    $region10: #{tpu_custom_call.1} parent=1 // pred_check
      _
    $region11: #{tpu_custom_call.1} parent=1 // pred_check_branch
      %20 = sbr.rel (0) target = $region13
    $region12: #{tpu_custom_call.1} parent=1 // pred_region
      _
    $region13: #{tpu_custom_call.1} parent=1 // pred_fallthru
      _
    // Predicated region
    $region14: #{tpu_custom_call.1} parent=1 // pred_check
      _
    $region15: #{tpu_custom_call.1} parent=1 // pred_check_branch
      %22 = sbr.rel (0) target = $region17
    $region16: #{tpu_custom_call.1} parent=1 // pred_region
      _
    $region17: #{tpu_custom_call.1} parent=1 // pred_fallthru
      _
    // Predicated region
    $region18: #{tpu_custom_call.1} parent=1 // pred_check
      _
    $region19: #{tpu_custom_call.1} parent=1 // pred_check_branch
      %24 = sbr.rel (0) target = $region21
    $region20: #{tpu_custom_call.1} parent=1 // pred_region
      _
    $region21: #{tpu_custom_call.1} parent=1 // pred_fallthru
      _
    // Predicated region
    $region22: #{tpu_custom_call.1} parent=1 // pred_check
      _
    $region23: #{tpu_custom_call.1} parent=1 // pred_check_branch
      %26 = sbr.rel (0) target = $region25
    $region24: #{tpu_custom_call.1} parent=1 // pred_region
      _
    $region25: #{tpu_custom_call.1} parent=1 // pred_fallthru
      _
    // Predicated region
    $region26: #{tpu_custom_call.1} parent=1 // pred_check
      _
    $region27: #{tpu_custom_call.1} parent=1 // pred_check_branch
      %28 = sbr.rel (0) target = $region29
    $region28: #{tpu_custom_call.1} parent=1 // pred_region
      _
    $region29: #{tpu_custom_call.1} parent=1 // pred_fallthru
      _
    %v29 = vld [vmem:[%s0] sm:$0xff]
    %v30 = vld [vmem:[%s0 + $0x8] sm:$0x3]
    %v31 = vld [vmem:[%s1] sm:$0xff]
    %v32 = vld [vmem:[%s1 + $0x8] sm:$0x7f]
    %v33 = vld [vmem:[%s2] sm:$0xff]
    %v34 = vld [vmem:[%s2 + $0x8] sm:$0x7f]
    %36 = vset.pattern.permute.xlu0 0
    %37 = vperm.xlu0 %36, %v33
    %v38 = vpop.permute.xlu0 %37
    %41 = vset.pattern.permute.xlu0 0
    %42 = vperm.xlu0 %41, %v34
    %v43 = vpop.permute.xlu0 %42
    %vm45 = vcmask 80896
    %v47 = vsel %vm45, %v31, 0
    %v50 = vsel %vm45, %v32, 0
    %vm52 = vcmask 1041408
    %v54 = vsel %vm52, %v30, 0
    %56 = vmatprep.subr.mxu0 0.0
    %57 = vmatpush1.msra.mxu0 %v29
    %58 = vmatprep.subr.mxu0 0.0
    %59 = vmatpush1.msra.mxu0 %v54
    %60 = vmatprep.subr.mxu0 0.0
    %61 = vmatpush1.msra.mxu0 0.0
    %62 = vmatprep.subr.mxu0 0.0
    %63 = vmatpush1.msra.mxu0 0.0
    %64 = vmatprep.subr.mxu0 0.0
    %65 = vmatpush1.msra.mxu0 0.0
    %66 = vmatprep.subr.mxu0 0.0
    %67 = vmatpush1.msra.mxu0 0.0
    %68 = vmatprep.subr.mxu0 0.0
    %69 = vmatpush1.msra.mxu0 0.0
    %70 = vmatprep.subr.mxu0 0.0
    %71 = vmatpush1.msra.mxu0 0.0
    %72 = vmatprep.subr.mxu0 0.0
    %73 = vmatpush1.msra.mxu0 0.0
    %74 = vmatprep.subr.mxu0 0.0
    %75 = vmatpush1.msra.mxu0 0.0
    %76 = vmatprep.subr.mxu0 0.0
    %77 = vmatpush1.msra.mxu0 0.0
    %78 = vmatprep.subr.mxu0 0.0
    %79 = vmatpush1.msra.mxu0 0.0
    %80 = vmatprep.subr.mxu0 0.0
    %81 = vmatpush1.msra.mxu0 0.0
    %82 = vmatprep.subr.mxu0 0.0
    %83 = vmatpush1.msra.mxu0 0.0
    %84 = vmatprep.subr.mxu0 0.0
    %85 = vmatpush1.msra.mxu0 0.0
    %86 = vmatprep.subr.mxu0 0.0
    %87 = vmatpush1.msra.mxu0 0.0
    %88 = vmatprep.subr.mxu0 0.0
    %89 = vmatpush1.msra.mxu0 0.0
    %90 = vmatprep.subr.mxu0 0.0
    %91 = vmatpush1.msra.mxu0 0.0
    %92 = vmatprep.subr.mxu0 0.0
    %93 = vmatpush1.msra.mxu0 0.0
    %94 = vmatprep.subr.mxu0 0.0
    %95 = vmatpush1.msra.mxu0 0.0
    %96 = vmatprep.subr.mxu0 0.0
    %97 = vmatpush1.msra.mxu0 0.0
    %98 = vmatprep.subr.mxu0 0.0
    %99 = vmatpush1.msra.mxu0 0.0
    %100 = vmatprep.subr.mxu0 0.0
    %101 = vmatpush1.msra.mxu0 0.0
    %102 = vmatprep.subr.mxu0 0.0
    %103 = vmatpush1.msra.mxu0 0.0
    %104 = vmatprep.subr.mxu0 0.0
    %105 = vmatpush1.msra.mxu0 0.0
    %106 = vmatprep.subr.mxu0 0.0
    %107 = vmatpush1.msra.mxu0 0.0
    %108 = vmatprep.subr.mxu0 0.0
    %109 = vmatpush1.msra.mxu0 0.0
    %110 = vmatprep.subr.mxu0 0.0
    %111 = vmatpush1.msra.mxu0 0.0
    %112 = vmatprep.subr.mxu0 0.0
    %113 = vmatpush1.msra.mxu0 0.0
    %114 = vmatprep.subr.mxu0 0.0
    %115 = vmatpush1.msra.mxu0 0.0
    %116 = vmatprep.subr.mxu0 0.0
    %117 = vmatpush1.msra.mxu0 0.0
    %118 = vmatprep.subr.mxu0 0.0
    %119 = vmatpush1.msra.mxu0 0.0
    %120 = vmatprep.mubr.f32.mxu0 0.0
    %121 = vmatmul.mubr.f32.gmra.mrb[0].mxu0 %v47
    %v122 = vpop.f32.mrb[0].mxu0
    %v123 = vadd.f32 %v38, %v122
    %v124 = vpop.f32.mrb[0].mxu0
    %125 = vmatprep.mubr.f32.mxu0 0.0
    %126 = vmatmul.mubr.f32.gmra.mrb[0].mxu0 %v50
    %v127 = vpop.f32.mrb[0].mxu0
    %v128 = vadd.f32 %v43, %v127
    %v129 = vpop.f32.mrb[0].mxu0
    %130 = vdwg.mxu0
    %vm131 = vcmp.ge.f32.partialorder %v123, 0.0
    %vm132 = vcmp.ge.f32.partialorder %v128, 0.0
    %v133 = vmul.f32 %v123, 0.01
    %v134 = vmul.f32 %v128, 0.01
    %v135 = vsel %vm131, %v123, %v133
    %v136 = vsel %vm132, %v128, %v134
    %v137 = vld [vmem:[%s3] sm:$0xff]
    %v138 = vld [vmem:[%s3 + $0x8] sm:$0x7f]
    %v139 = vld [vmem:[%s4] sm:$0xff]
    %v140 = vld [vmem:[%s4 + $0x8] sm:$0x7f]
    %142 = vset.pattern.permute.xlu0 0
    %143 = vperm.xlu0 %142, %v139
    %v144 = vpop.permute.xlu0 %143
    %147 = vset.pattern.permute.xlu0 0
    %148 = vperm.xlu0 %147, %v140
    %v149 = vpop.permute.xlu0 %148
    %vm151 = vcmask 121856
    %v153 = vsel %vm151, %v137, 0
    %v156 = vsel %vm151, %v138, 0
    %vm158 = vcmask 1046528
    %v160 = vsel %vm158, %v136, 0
    %162 = vmatprep.subr.mxu0 0.0
    %163 = vmatpush1.msra.mxu0 %v135
    %164 = vmatprep.subr.mxu0 0.0
    %165 = vmatpush1.msra.mxu0 %v160
    %166 = vmatprep.subr.mxu0 0.0
    %167 = vmatpush1.msra.mxu0 0.0
    %168 = vmatprep.subr.mxu0 0.0
    %169 = vmatpush1.msra.mxu0 0.0
    %170 = vmatprep.subr.mxu0 0.0
    %171 = vmatpush1.msra.mxu0 0.0
    %172 = vmatprep.subr.mxu0 0.0
    %173 = vmatpush1.msra.mxu0 0.0
    %174 = vmatprep.subr.mxu0 0.0
    %175 = vmatpush1.msra.mxu0 0.0
    %176 = vmatprep.subr.mxu0 0.0
    %177 = vmatpush1.msra.mxu0 0.0
    %178 = vmatprep.subr.mxu0 0.0
    %179 = vmatpush1.msra.mxu0 0.0
    %180 = vmatprep.subr.mxu0 0.0
    %181 = vmatpush1.msra.mxu0 0.0
    %182 = vmatprep.subr.mxu0 0.0
    %183 = vmatpush1.msra.mxu0 0.0
    %184 = vmatprep.subr.mxu0 0.0
    %185 = vmatpush1.msra.mxu0 0.0
    %186 = vmatprep.subr.mxu0 0.0
    %187 = vmatpush1.msra.mxu0 0.0
    %188 = vmatprep.subr.mxu0 0.0
    %189 = vmatpush1.msra.mxu0 0.0
    %190 = vmatprep.subr.mxu0 0.0
    %191 = vmatpush1.msra.mxu0 0.0
    %192 = vmatprep.subr.mxu0 0.0
    %193 = vmatpush1.msra.mxu0 0.0
    %194 = vmatprep.subr.mxu0 0.0
    %195 = vmatpush1.msra.mxu0 0.0
    %196 = vmatprep.subr.mxu0 0.0
    %197 = vmatpush1.msra.mxu0 0.0
    %198 = vmatprep.subr.mxu0 0.0
    %199 = vmatpush1.msra.mxu0 0.0
    %200 = vmatprep.subr.mxu0 0.0
    %201 = vmatpush1.msra.mxu0 0.0
    %202 = vmatprep.subr.mxu0 0.0
    %203 = vmatpush1.msra.mxu0 0.0
    %204 = vmatprep.subr.mxu0 0.0
    %205 = vmatpush1.msra.mxu0 0.0
    %206 = vmatprep.subr.mxu0 0.0
    %207 = vmatpush1.msra.mxu0 0.0
    %208 = vmatprep.subr.mxu0 0.0
    %209 = vmatpush1.msra.mxu0 0.0
    %210 = vmatprep.subr.mxu0 0.0
    %211 = vmatpush1.msra.mxu0 0.0
    %212 = vmatprep.subr.mxu0 0.0
    %213 = vmatpush1.msra.mxu0 0.0
    %214 = vmatprep.subr.mxu0 0.0
    %215 = vmatpush1.msra.mxu0 0.0
    %216 = vmatprep.subr.mxu0 0.0
    %217 = vmatpush1.msra.mxu0 0.0
    %218 = vmatprep.subr.mxu0 0.0
    %219 = vmatpush1.msra.mxu0 0.0
    %220 = vmatprep.subr.mxu0 0.0
    %221 = vmatpush1.msra.mxu0 0.0
    %222 = vmatprep.subr.mxu0 0.0
    %223 = vmatpush1.msra.mxu0 0.0
    %224 = vmatprep.subr.mxu0 0.0
    %225 = vmatpush1.msra.mxu0 0.0
    %226 = vmatprep.mubr.f32.mxu0 0.0
    %227 = vmatmul.mubr.f32.gmra.mrb[0].mxu0 %v153
    %v228 = vpop.f32.mrb[0].mxu0
    %v229 = vadd.f32 %v144, %v228
    %v230 = vpop.f32.mrb[0].mxu0
    %231 = vmatprep.mubr.f32.mxu0 0.0
    %232 = vmatmul.mubr.f32.gmra.mrb[0].mxu0 %v156
    %v233 = vpop.f32.mrb[0].mxu0
    %v234 = vadd.f32 %v149, %v233
    %v235 = vpop.f32.mrb[0].mxu0
    %236 = vdwg.mxu0
    %v237 = vsub.f32 0.0, %v229
    %v238 = vsub.f32 0.0, %v234
    %v239 = vmin.f32 %v237, 60.0
    %v240 = vmin.f32 %v238, 60.0
    %v241 = vmul.f32 %v239, 1.442695
    %v242 = vpow.pop %v241
    %v243 = vmul.f32 %v240, 1.442695
    %v244 = vpow.pop %v243
    %v245 = vadd.f32 %v242, 1.0
    %v246 = vadd.f32 %v244, 1.0
    %v247 = vrcp.pop %v245
    %v248 = vrcp.pop %v246
    %v249 = vld [vmem:[%s5] sm:$0x1]
    %v250 = vlaneseq
    %v251 = vshrl.u32 %v250, 7
    %v252 = vsub.s32 0, %v251
    %v253 = vrot.slane %v249, %v252
    %255 = vbcast.lane.b32.xlu0 %v253, 256
    %v256 = vpop.permute.xlu0 %255
    %s258 = sor.u32 256, 8
    %259 = vbcast.lane.b32.xlu0 %v253, %s258
    %v260 = vpop.permute.xlu0 %259
    %v261 = vmul.f32 %v256, %v247
    %v262 = vmul.f32 %v260, %v248
    %v263 = vsel %vm158, %v262, 0.0
    %v264 = vadd.f32 %v261, %v263
    %v265 = vrot.slane %v264, 4
    %v266 = vadd.f32 %v264, %v265
    %v267 = vrot.slane %v266, 2
    %v268 = vadd.f32 %v266, %v267
    %v269 = vrot.slane %v268, 1
    %v270 = vadd.f32 %v268, %v269
    %v271 = vld [vmem:[#allocation2] sm:$0x1]
    %273 = vset.pattern.permute.xlu0 0
    %274 = vperm.xlu0 %273, %v271
    %v275 = vpop.permute.xlu0 %274
    %v277 = vlaneseq
    %v278 = vshrl.u32 %v277, 7
    %v279 = vsub.s32 0, %v278
    %v280 = vrot.slane %v275, %v279
    %v281 = vadd.f32 %v270, %v280
    %282 = vst [vmem:[#allocation3] sm:$0x1] %v281
    // Predicated region
    $region30: #{tpu_custom_call.1} parent=1 // pred_check
      _
    $region31: #{tpu_custom_call.1} parent=1 // pred_check_branch
      %284 = sbr.rel (0) target = $region33
    $region32: #{tpu_custom_call.1} parent=1 // pred_region
      %s286 = ssub.s32 16, 16
      %287 = vsyncadd [#allocation4], %s286
      %s289 = sshll.u32 [#allocation3], 4
      %s290 = int_to_ptr.vmem [resolvable:$true] %s289
      %292 = dma.vmem_to_hbm [thread:$0]  %s290, 16, %s7, [#allocation4]
    $region33: #{tpu_custom_call.1} parent=1 // pred_fallthru
      _
    // Predicated region
    $region34: #{tpu_custom_call.1} parent=1 // pred_check
      _
    $region35: #{tpu_custom_call.1} parent=1 // pred_check_branch
      %294 = sbr.rel (0) target = $region37
    $region36: #{tpu_custom_call.1} parent=1 // pred_region
      %295 = dma.done [#allocation4], 16
    $region37: #{tpu_custom_call.1} parent=1 // pred_fallthru
      _
    %296 = vsyncpa [#allocation4], 1

</llo_original>
